<compile_context>
chip_gen: v5e
topology: v5e:2x2
jax: 0.10.0
libtpu: 0.0.40
codegen_flags: <defaults>
</compile_context>

<pallas_src>
import functools

import jax
import jax.numpy as jnp
from jax.experimental import pallas as pl
from jax.experimental.pallas import tpu as pltpu


_LANE = 128
_SUBLANE = 8


def _round_up(x, m):
    return ((x + m - 1) // m) * m


def _choose_row_tile(packed_rows, lane_width, itemsize, sublane_mult):
    """Pick the per-step row tile and the scoped-VMEM limit."""
    try:
        cap = int(pltpu.get_tpu_info().vmem_capacity_bytes)
    except Exception:
        cap = 64 * 1024 * 1024  # conservative fallback (v7x per-TC VMEM)
    vmem_limit = (cap * 3) // 4

    # ~8 MiB of input per grid step on large-VMEM parts (v5e/v6e, 128 MiB),
    # ~4 MiB on v7x (64 MiB per TC): big enough to sit on the HBM roofline,
    # small enough to leave double-buffering headroom.
    target_block_bytes = (8 << 20) if cap >= (100 << 20) else (4 << 20)

    # Live bytes per packed row: double-buffered input + double-buffered output
    # + ~6 f32 temporaries (x, diff, diff^2, mu/inv broadcasts, out).
    per_row_bytes = lane_width * (2 * itemsize + 2 * itemsize + 6 * 4)
    tr_cap = max(sublane_mult, (vmem_limit // 2) // per_row_bytes)

    tr = max(sublane_mult, target_block_bytes // (lane_width * itemsize))
    tr = min(tr, tr_cap)
    tr = max(sublane_mult, (tr // sublane_mult) * sublane_mult)

    # >= 2 grid steps when the rows allow it (feeds both v7x TensorCores) and
    # balance the blocks so the trailing edge block isn't tiny.
    n_blocks = -(-packed_rows // tr)
    if packed_rows > sublane_mult:
        n_blocks = max(n_blocks, 2)
    tr = min(tr, _round_up(-(-packed_rows // n_blocks), sublane_mult))
    tr = max(sublane_mult, tr)
    return tr, vmem_limit


def _layernorm_kernel_plain(x_ref, a_ref, b_ref, o_ref, *, eps, d):
    """One logical row per kernel row (d_hid >= 128 or a non-divisor of 128)."""
    x = x_ref[...].astype(jnp.float32)
    eps32 = jnp.float32(eps)
    inv_dm1 = jnp.float32(1.0 / (d - 1)) if d > 1 else jnp.float32(float("nan"))

    mu = jnp.sum(x, axis=-1, keepdims=True) * jnp.float32(1.0 / d)
    diff = x - mu
    var = jnp.sum(diff * diff, axis=-1, keepdims=True) * inv_dm1
    sigma = jnp.sqrt(var)
    inv = jnp.float32(1.0) / (sigma + eps32)          # exact; free under the DMA
    out = diff * inv
    o_ref[...] = (out * a_ref[...].astype(jnp.float32)
                  + b_ref[...].astype(jnp.float32)).astype(o_ref.dtype)


def _layernorm_kernel_packed(x_ref, a_ref, b_ref, s_ref, st_ref, o_ref, *, eps, d):
    """Lane-dense path: each kernel row packs g = 128 // d logical rows.

    x_ref: (TR, g*d) packed rows; a_ref/b_ref: (1, g*d) tiled scale/shift;
    s_ref: (g*d, g) one-hot segment-reduce matrix; st_ref: (g, g*d) broadcast matrix.
    """
    x = x_ref[...].astype(jnp.float32)
    S = s_ref[...]
    ST = st_ref[...]
    eps32 = jnp.float32(eps)
    inv_dm1 = jnp.float32(1.0 / (d - 1)) if d > 1 else jnp.float32(float("nan"))

    sum_x = jnp.dot(x, S, preferred_element_type=jnp.float32)          # (TR, g)
    mu = sum_x * jnp.float32(1.0 / d)
    diff = x - jnp.dot(mu, ST, preferred_element_type=jnp.float32)      # (TR, g*d)
    sumsq = jnp.dot(diff * diff, S, preferred_element_type=jnp.float32)  # (TR, g)
    sigma = jnp.sqrt(sumsq * inv_dm1)
    inv = jnp.float32(1.0) / (sigma + eps32)                            # exact
    out = diff * jnp.dot(inv, ST, preferred_element_type=jnp.float32)
    o_ref[...] = (out * a_ref[...].astype(jnp.float32)
                  + b_ref[...].astype(jnp.float32)).astype(o_ref.dtype)


def layer_normalization(z, a_2, b_2, *, eps=0.001):
    """Pallas implementation of LayerNormalization.forward.

    z:    (..., d_hid) array (e.g. (B, S, d_hid))
    a_2:  (d_hid,) scale parameter
    b_2:  (d_hid,) shift parameter
    """
    # Quirk of the PyTorch module: if the second dim is 1, return z untouched.
    if z.ndim >= 2 and z.shape[1] == 1:
        return z

    d_hid = z.shape[-1]
    orig_shape = z.shape
    rows = 1
    for s in orig_shape[:-1]:
        rows *= s

    # Lane-dense packing: if d_hid divides 128, pack g logical rows per kernel
    # row so the store lane dimension is a full 128 wide.
    # TODO(synk): d_hid that is neither a multiple nor a divisor of 128 keeps a
    # partial-lane output block (masked vst); zero-padding the lane dim would
    # trade that for two extra full HBM passes (pad + slice), a net loss here.
    if d_hid < _LANE and _LANE % d_hid == 0:
        g = _LANE // d_hid
    else:
        g = 1
    lane_width = g * d_hid

    itemsize = jnp.dtype(z.dtype).itemsize
    # Native sublane packing: 8 rows for 4-byte, 16 for 2-byte, 32 for 1-byte.
    sublane_mult = max(_SUBLANE, (_SUBLANE * 4) // max(1, itemsize))

    x2d = z.reshape(rows, d_hid)

    # Pad only when packing strictly requires rows % g == 0 (the reshape itself
    # is free / contiguous). Partial trailing tiles are handled by Pallas edge
    # masking, so we never pad to a multiple of the row tile.
    padded_rows = _round_up(rows, g)
    if padded_rows != rows:
        x2d = jnp.pad(x2d, ((0, padded_rows - rows), (0, 0)))
    packed_rows = padded_rows // g
    x_packed = x2d.reshape(packed_rows, lane_width)

    tr, vmem_limit = _choose_row_tile(packed_rows, lane_width, itemsize, sublane_mult)
    grid = (pl.cdiv(packed_rows, tr),)

    if g > 1:
        # One-hot segment matrices, built once here (constants), re-used by every
        # grid step (same block index -> DMA elided after the first iteration).
        seg = jnp.arange(lane_width, dtype=jnp.int32) // d_hid            # (lane,)
        S = (seg[:, None] == jnp.arange(g, dtype=jnp.int32)[None, :]).astype(jnp.float32)
        ST = S.T
        a_in = jnp.tile(a_2.reshape(-1), g).reshape(1, lane_width)
        b_in = jnp.tile(b_2.reshape(-1), g).reshape(1, lane_width)
        kernel = functools.partial(_layernorm_kernel_packed, eps=eps, d=d_hid)
        in_specs = [
            pl.BlockSpec((tr, lane_width), lambda i: (i, 0)),
            pl.BlockSpec((1, lane_width), lambda i: (0, 0)),
            pl.BlockSpec((1, lane_width), lambda i: (0, 0)),
            pl.BlockSpec((lane_width, g), lambda i: (0, 0)),
            pl.BlockSpec((g, lane_width), lambda i: (0, 0)),
        ]
        args = (x_packed, a_in, b_in, S, ST)
    else:
        a_in = a_2.reshape(1, lane_width)
        b_in = b_2.reshape(1, lane_width)
        kernel = functools.partial(_layernorm_kernel_plain, eps=eps, d=d_hid)
        in_specs = [
            pl.BlockSpec((tr, lane_width), lambda i: (i, 0)),
            pl.BlockSpec((1, lane_width), lambda i: (0, 0)),
            pl.BlockSpec((1, lane_width), lambda i: (0, 0)),
        ]
        args = (x_packed, a_in, b_in)

    out_packed = pl.pallas_call(
        kernel,
        out_shape=jax.ShapeDtypeStruct((packed_rows, lane_width), z.dtype),
        grid_spec=pltpu.PrefetchScalarGridSpec(
            num_scalar_prefetch=0,
            grid=grid,
            in_specs=in_specs,
            out_specs=pl.BlockSpec((tr, lane_width), lambda i: (i, 0)),
        ),
        compiler_params=pltpu.CompilerParams(
            dimension_semantics=("parallel",),
            vmem_limit_bytes=int(vmem_limit),
        ),
    )(*args)

    if padded_rows != rows:
        out2d = out_packed.reshape(padded_rows, d_hid)[:rows]
    else:
        out2d = out_packed.reshape(rows, d_hid)
    return out2d.reshape(orig_shape)


def _reference(z, a_2, b_2, eps=0.001):
    if z.ndim >= 2 and z.shape[1] == 1:
        return z
    z32 = z.astype(jnp.float32)
    mu = jnp.mean(z32, axis=-1, keepdims=True)
    d = z.shape[-1]
    sigma = jnp.sqrt(jnp.sum((z32 - mu) ** 2, axis=-1, keepdims=True) / (d - 1))
    out = (z32 - mu) / (sigma + eps)
    return (out * a_2 + b_2).astype(z.dtype)


if __name__ == "__main__":
    key = jax.random.PRNGKey(0)
    eps = 0.001
    k1, k2, k3 = jax.random.split(key, 3)

    # Case 1: module-sized example (batch=2, seq=8, d_hid=32) -> packed path (g=4),
    # no wrapper pad/slice, single balanced grid step.
    z1 = jax.random.normal(k1, (2, 8, 32), dtype=jnp.float32)
    a1 = jnp.ones((32,), dtype=jnp.float32)   # nn.Parameter(torch.ones(d_hid))
    b1 = jnp.zeros((32,), dtype=jnp.float32)  # nn.Parameter(torch.zeros(d_hid))
    out1 = jax.block_until_ready(layer_normalization(z1, a1, b1, eps=eps))
    ref1 = _reference(z1, a1, b1, eps=eps)
    assert out1.shape == z1.shape and out1.dtype == z1.dtype
    assert jnp.allclose(out1, ref1, atol=2e-4, rtol=2e-4), "packed-path mismatch"

    # Case 2: d_hid >= 128, odd row count -> plain path, edge-masked trailing tile
    # (no wrapper pad, no output slice).
    z2 = jax.random.normal(k2, (3, 5, 256), dtype=jnp.float32)
    a2 = jnp.linspace(0.5, 1.5, 256, dtype=jnp.float32)
    b2 = jnp.linspace(-0.1, 0.1, 256, dtype=jnp.float32)
    out2 = jax.block_until_ready(layer_normalization(z2, a2, b2, eps=eps))
    ref2 = _reference(z2, a2, b2, eps=eps)
    assert out2.shape == z2.shape and out2.dtype == z2.dtype
    assert jnp.allclose(out2, ref2, atol=2e-4, rtol=2e-4), "plain-path mismatch"

    # Case 3: packed path where rows % g != 0 -> exercises the (unavoidable)
    # minimal pad + output slice branch.
    z3 = jax.random.normal(k3, (2, 7, 32), dtype=jnp.float32)
    out3 = jax.block_until_ready(layer_normalization(z3, a1, b1, eps=eps))
    ref3 = _reference(z3, a1, b1, eps=eps)
    assert out3.shape == z3.shape and out3.dtype == z3.dtype
    assert jnp.allclose(out3, ref3, atol=2e-4, rtol=2e-4), "packed-pad-path mismatch"

    print("KERNEL_OK")
</pallas_src>

<mosaic_0001>
module attributes {stable_mosaic.version = 11 : i64} {
  func.func @_layernorm_kernel_packed(%arg0: i32, %arg1: memref<8x128xf32, #tpu.memory_space<vmem>>, %arg2: memref<1x128xf32, #tpu.memory_space<vmem>>, %arg3: memref<1x128xf32, #tpu.memory_space<vmem>>, %arg4: memref<128x4xf32, #tpu.memory_space<vmem>>, %arg5: memref<4x128xf32, #tpu.memory_space<vmem>>, %arg6: memref<8x128xf32, #tpu.memory_space<vmem>>) attributes {dimension_semantics = [#tpu.dimension_semantics<parallel>], iteration_bounds = array<i64: 1>, scalar_prefetch = 0 : i64, scratch_operands = 0 : i64, tpu.core_type = #tpu.core_type<tc>, window_params = [{transform_indices = @transform_0, window_bounds = array<i64: 8, 128>}, {pipeline_mode = #tpu.pipeline_mode<synchronous>, transform_indices = @transform_1, window_bounds = array<i64: 1, 128>}, {pipeline_mode = #tpu.pipeline_mode<synchronous>, transform_indices = @transform_2, window_bounds = array<i64: 1, 128>}, {pipeline_mode = #tpu.pipeline_mode<synchronous>, transform_indices = @transform_3, window_bounds = array<i64: 128, 4>}, {pipeline_mode = #tpu.pipeline_mode<synchronous>, transform_indices = @transform_4, window_bounds = array<i64: 4, 128>}, {transform_indices = @transform_5, window_bounds = array<i64: 8, 128>}]} {
    %c0 = arith.constant 0 : index
    %c0_0 = arith.constant 0 : index
    %0 = vector.load %arg1[%c0, %c0_0] : memref<8x128xf32, #tpu.memory_space<vmem>>, vector<8x128xf32>
    %c0_1 = arith.constant 0 : index
    %c0_2 = arith.constant 0 : index
    %1 = vector.load %arg4[%c0_1, %c0_2] : memref<128x4xf32, #tpu.memory_space<vmem>>, vector<128x4xf32>
    %c0_3 = arith.constant 0 : index
    %c0_4 = arith.constant 0 : index
    %2 = vector.load %arg5[%c0_3, %c0_4] : memref<4x128xf32, #tpu.memory_space<vmem>>, vector<4x128xf32>
    %cst = arith.constant dense<0.000000e+00> : vector<8x4xf32>
    %3 = tpu.matmul %0, %1, %cst {dimension_numbers = #tpu.dot_dimension_numbers<[1], [0], [0], [1], [0, 0, 1, 1], [], []>} : vector<8x128xf32>, vector<128x4xf32>, vector<8x4xf32> -> vector<8x4xf32>
    %cst_5 = arith.constant 3.125000e-02 : f32
    %4 = vector.broadcast %cst_5 : f32 to vector<8x4xf32>
    %5 = arith.mulf %3, %4 : vector<8x4xf32>
    %cst_6 = arith.constant dense<0.000000e+00> : vector<8x128xf32>
    %6 = tpu.matmul %5, %2, %cst_6 {dimension_numbers = #tpu.dot_dimension_numbers<[1], [0], [0], [1], [0, 0, 1, 1], [], []>} : vector<8x4xf32>, vector<4x128xf32>, vector<8x128xf32> -> vector<8x128xf32>
    %7 = arith.subf %0, %6 : vector<8x128xf32>
    %8 = arith.mulf %7, %7 : vector<8x128xf32>
    %cst_7 = arith.constant dense<0.000000e+00> : vector<8x4xf32>
    %9 = tpu.matmul %8, %1, %cst_7 {dimension_numbers = #tpu.dot_dimension_numbers<[1], [0], [0], [1], [0, 0, 1, 1], [], []>} : vector<8x128xf32>, vector<128x4xf32>, vector<8x4xf32> -> vector<8x4xf32>
    %cst_8 = arith.constant 0.0322580636 : f32
    %10 = vector.broadcast %cst_8 : f32 to vector<8x4xf32>
    %11 = arith.mulf %9, %10 : vector<8x4xf32>
    %12 = math.sqrt %11 : vector<8x4xf32>
    %cst_9 = arith.constant 1.000000e-03 : f32
    %13 = vector.broadcast %cst_9 : f32 to vector<8x4xf32>
    %14 = arith.addf %12, %13 : vector<8x4xf32>
    %cst_10 = arith.constant 1.000000e+00 : f32
    %15 = vector.broadcast %cst_10 : f32 to vector<8x4xf32>
    %16 = arith.divf %15, %14 : vector<8x4xf32>
    %cst_11 = arith.constant dense<0.000000e+00> : vector<8x128xf32>
    %17 = tpu.matmul %16, %2, %cst_11 {dimension_numbers = #tpu.dot_dimension_numbers<[1], [0], [0], [1], [0, 0, 1, 1], [], []>} : vector<8x4xf32>, vector<4x128xf32>, vector<8x128xf32> -> vector<8x128xf32>
    %18 = arith.mulf %7, %17 : vector<8x128xf32>
    %c0_12 = arith.constant 0 : index
    %c0_13 = arith.constant 0 : index
    %19 = vector.load %arg2[%c0_12, %c0_13] : memref<1x128xf32, #tpu.memory_space<vmem>>, vector<1x128xf32>
    %20 = vector.broadcast %19 : vector<1x128xf32> to vector<8x128xf32>
    %21 = arith.mulf %18, %20 : vector<8x128xf32>
    %c0_14 = arith.constant 0 : index
    %c0_15 = arith.constant 0 : index
    %22 = vector.load %arg3[%c0_14, %c0_15] : memref<1x128xf32, #tpu.memory_space<vmem>>, vector<1x128xf32>
    %23 = vector.broadcast %22 : vector<1x128xf32> to vector<8x128xf32>
    %24 = arith.addf %21, %23 : vector<8x128xf32>
    %c0_16 = arith.constant 0 : index
    %c0_17 = arith.constant 0 : index
    %25 = vector.load %arg6[%c0_16, %c0_17] : memref<8x128xf32, #tpu.memory_space<vmem>>, vector<8x128xf32>
    tpu.vector_store %arg6[%c0_16, %c0_17], %24 {strides = array<i32>} : memref<8x128xf32, #tpu.memory_space<vmem>>, vector<8x128xf32>,
    return
  }
  func.func @transform_0(%arg0: i32) -> (i32, i32) {
    %c0_i32 = arith.constant 0 : i32
    %c0_i32_0 = arith.constant 0 : i32
    return %arg0, %c0_i32 : i32, i32
  }
  func.func @transform_1(%arg0: i32) -> (i32, i32) {
    %c0_i32 = arith.constant 0 : i32
    %c0_i32_0 = arith.constant 0 : i32
    %c0_i32_1 = arith.constant 0 : i32
    return %c0_i32, %c0_i32_0 : i32, i32
  }
  func.func @transform_2(%arg0: i32) -> (i32, i32) {
    %c0_i32 = arith.constant 0 : i32
    %c0_i32_0 = arith.constant 0 : i32
    %c0_i32_1 = arith.constant 0 : i32
    return %c0_i32, %c0_i32_0 : i32, i32
  }
  func.func @transform_3(%arg0: i32) -> (i32, i32) {
    %c0_i32 = arith.constant 0 : i32
    %c0_i32_0 = arith.constant 0 : i32
    %c0_i32_1 = arith.constant 0 : i32
    return %c0_i32, %c0_i32_0 : i32, i32
  }
  func.func @transform_4(%arg0: i32) -> (i32, i32) {
    %c0_i32 = arith.constant 0 : i32
    %c0_i32_0 = arith.constant 0 : i32
    %c0_i32_1 = arith.constant 0 : i32
    return %c0_i32, %c0_i32_0 : i32, i32
  }
  func.func @transform_5(%arg0: i32) -> (i32, i32) {
    %c0_i32 = arith.constant 0 : i32
    %c0_i32_0 = arith.constant 0 : i32
    return %arg0, %c0_i32 : i32, i32
  }
}

</mosaic_0001>

<llo_original>
// kernel: tpu_custom_call.1
$region0: #{tpu_custom_call.1}
  #allocation0 [shape = 'u32[]', space=smem, size = 0x4, offset = 0x4, fixed_abs, tag = 'smem constant byte address 0x4 - core index']
  #allocation1 [shape = 'u32[72,128]{1,0:T(1,128)}', space=vmem, size = 0x9000, scoped, tag = 'internal scratch']
  %s0 = inlined_call_operand.vmem [shape: f32[4,128], index: 0, kind: input, shape index: {}]
  %s1 = inlined_call_operand.vmem [shape: f32[1,128], index: 1, kind: input, shape index: {}]
  %s2 = inlined_call_operand.vmem [shape: f32[1,128], index: 2, kind: input, shape index: {}]
  %s3 = inlined_call_operand.vmem [shape: f32[128,4], index: 3, kind: input, shape index: {}]
  %s4 = inlined_call_operand.vmem [shape: f32[4,128], index: 4, kind: input, shape index: {}]
  %s5 = inlined_call_operand.hbm [shape: f32[4,128], index: 5, kind: output, shape index: {}]
  %s6 = sld [smem:[#allocation0]]
  $region30: #{tpu_custom_call.1} parent=0
    _
  %s8 = ssub.s32 1, %s6
  %s9 = scalar_select 0, %s8, %s6
  $region1: #{tpu_custom_call.1} parent=0
    #allocation2 [shape = 'u8[4096]{0}', space=vmem, size = 0x1000, scoped, tag = 'output window, operand 0, single buffered']
    #allocation3 [shape = 's32[1]{0}', space=sflag, size = 0x4, scoped, tag = 'scoped memory for tpu_custom_call.1']
    %10 = vsyncpa [#allocation3], 0
    // Predicated region
    $region2: #{tpu_custom_call.1} parent=1 // pred_check
      _
    $region3: #{tpu_custom_call.1} parent=1 // pred_check_branch
      %12 = sbr.rel (0) target = $region5
    $region4: #{tpu_custom_call.1} parent=1 // pred_region
      _
    $region5: #{tpu_custom_call.1} parent=1 // pred_fallthru
      _
    // Predicated region
    $region6: #{tpu_custom_call.1} parent=1 // pred_check
      _
    $region7: #{tpu_custom_call.1} parent=1 // pred_check_branch
      %14 = sbr.rel (0) target = $region9
    $region8: #{tpu_custom_call.1} parent=1 // pred_region
      _
    $region9: #{tpu_custom_call.1} parent=1 // pred_fallthru
      _
    // Predicated region
    $region10: #{tpu_custom_call.1} parent=1 // pred_check
      _
    $region11: #{tpu_custom_call.1} parent=1 // pred_check_branch
      %16 = sbr.rel (0) target = $region13
    $region12: #{tpu_custom_call.1} parent=1 // pred_region
      _
    $region13: #{tpu_custom_call.1} parent=1 // pred_fallthru
      _
    // Predicated region
    $region14: #{tpu_custom_call.1} parent=1 // pred_check
      _
    $region15: #{tpu_custom_call.1} parent=1 // pred_check_branch
      %18 = sbr.rel (0) target = $region17
    $region16: #{tpu_custom_call.1} parent=1 // pred_region
      _
    $region17: #{tpu_custom_call.1} parent=1 // pred_fallthru
      _
    // Predicated region
    $region18: #{tpu_custom_call.1} parent=1 // pred_check
      _
    $region19: #{tpu_custom_call.1} parent=1 // pred_check_branch
      %20 = sbr.rel (0) target = $region21
    $region20: #{tpu_custom_call.1} parent=1 // pred_region
      _
    $region21: #{tpu_custom_call.1} parent=1 // pred_fallthru
      _
    %v21 = vld [vmem:[%s0] sm:$0xff]
    %v22 = vld [vmem:[%s3] sm:$0xff]
    %v23 = vld [vmem:[%s3 + $0x8] sm:$0xff]
    %v24 = vld [vmem:[%s3 + $0x10] sm:$0xff]
    %v25 = vld [vmem:[%s3 + $0x18] sm:$0xff]
    %v26 = vld [vmem:[%s3 + $0x20] sm:$0xff]
    %v27 = vld [vmem:[%s3 + $0x28] sm:$0xff]
    %v28 = vld [vmem:[%s3 + $0x30] sm:$0xff]
    %v29 = vld [vmem:[%s3 + $0x38] sm:$0xff]
    %v30 = vld [vmem:[%s3 + $0x40] sm:$0xff]
    %v31 = vld [vmem:[%s3 + $0x48] sm:$0xff]
    %v32 = vld [vmem:[%s3 + $0x50] sm:$0xff]
    %v33 = vld [vmem:[%s3 + $0x58] sm:$0xff]
    %v34 = vld [vmem:[%s3 + $0x60] sm:$0xff]
    %v35 = vld [vmem:[%s3 + $0x68] sm:$0xff]
    %v36 = vld [vmem:[%s3 + $0x70] sm:$0xff]
    %v37 = vld [vmem:[%s3 + $0x78] sm:$0xff]
    %v38 = vld [vmem:[%s4] sm:$0xf]
    %39 = vmatpush.msra.mxu0 %v37
    %40 = vmatpush.msra.mxu0 %v36
    %41 = vmatpush.msra.mxu0 %v35
    %42 = vmatpush.msra.mxu0 %v34
    %43 = vmatpush.msra.mxu0 %v33
    %44 = vmatpush.msra.mxu0 %v32
    %45 = vmatpush.msra.mxu0 %v31
    %46 = vmatpush.msra.mxu0 %v30
    %47 = vmatpush.msra.mxu0 %v29
    %48 = vmatpush.msra.mxu0 %v28
    %49 = vmatpush.msra.mxu0 %v27
    %50 = vmatpush.msra.mxu0 %v26
    %51 = vmatpush.msra.mxu0 %v25
    %52 = vmatpush.msra.mxu0 %v24
    %53 = vmatpush.msra.mxu0 %v23
    %54 = vmatpush.msra.mxu0 %v22
    %55 = vmatmul.f32.gmra.mxu0 %v21
    %v56 = vpop.f32.mrf.mxu0
    %v57 = vadd.f32 0.0, %v56
    %58 = vdwg.mxu0
    %v59 = vmul.f32 %v57, 0.03125
    %vm60 = vcmask 31744
    %v62 = vsel %vm60, %v59, 0
    %vm64 = vcmask 1043456
    %v66 = vsel %vm64, %v38, 0
    %68 = vmatpush.msra.mxu0 0.0
    %69 = vmatpush.msra.mxu0 0.0
    %70 = vmatpush.msra.mxu0 0.0
    %71 = vmatpush.msra.mxu0 0.0
    %72 = vmatpush.msra.mxu0 0.0
    %73 = vmatpush.msra.mxu0 0.0
    %74 = vmatpush.msra.mxu0 0.0
    %75 = vmatpush.msra.mxu0 0.0
    %76 = vmatpush.msra.mxu0 0.0
    %77 = vmatpush.msra.mxu0 0.0
    %78 = vmatpush.msra.mxu0 0.0
    %79 = vmatpush.msra.mxu0 0.0
    %80 = vmatpush.msra.mxu0 0.0
    %81 = vmatpush.msra.mxu0 0.0
    %82 = vmatpush.msra.mxu0 0.0
    %83 = vmatpush.msra.mxu0 %v66
    %84 = vmatmul.f32.gmra.mxu0 %v62
    %v85 = vpop.f32.mrf.mxu0
    %v86 = vadd.f32 0.0, %v85
    %87 = vdwg.mxu0
    %v88 = vsub.f32 %v21, %v86
    %v89 = vmul.f32 %v88, %v88
    %90 = vmatpush.msra.mxu0 %v37
    %91 = vmatpush.msra.mxu0 %v36
    %92 = vmatpush.msra.mxu0 %v35
    %93 = vmatpush.msra.mxu0 %v34
    %94 = vmatpush.msra.mxu0 %v33
    %95 = vmatpush.msra.mxu0 %v32
    %96 = vmatpush.msra.mxu0 %v31
    %97 = vmatpush.msra.mxu0 %v30
    %98 = vmatpush.msra.mxu0 %v29
    %99 = vmatpush.msra.mxu0 %v28
    %100 = vmatpush.msra.mxu0 %v27
    %101 = vmatpush.msra.mxu0 %v26
    %102 = vmatpush.msra.mxu0 %v25
    %103 = vmatpush.msra.mxu0 %v24
    %104 = vmatpush.msra.mxu0 %v23
    %105 = vmatpush.msra.mxu0 %v22
    %106 = vmatmul.f32.gmra.mxu0 %v89
    %v107 = vpop.f32.mrf.mxu0
    %v108 = vadd.f32 0.0, %v107
    %109 = vdwg.mxu0
    %v110 = vmul.f32 %v108, 0.032258064
    %v111 = vrsqrt.pop %v110
    %v112 = vmul.f32 %v111, %v110
    %v113 = vmul.f32 %v112, %v111
    %v114 = vmul.f32 0.5, %v113
    %v115 = vsub.f32 1.5, %v114
    %v116 = vmul.f32 %v111, %v115
    %v117 = vmul.f32 %v110, %v116
    %vm118 = vcmp.eq.f32.partialorder %v110, inf
    %v119 = vsel %vm118, %v110, %v117
    %vm120 = vcmp.eq.f32.partialorder %v110, 0.0
    %v121 = vand.u32 %v110, 2147483648
    %v122 = vsel %vm120, %v121, %v119
    %v123 = vadd.f32 %v122, 0.001
    %v124 = vrcp.pop %v123
    %v125 = vmul.f32 %v123, %v124
    %v126 = vsub.f32 1.0, %v125
    %v127 = vmul.f32 %v124, %v126
    %v128 = vadd.f32 %v124, %v127
    %vm129 = vweird.f32 %v123
    %vm130 = vweird.f32 %v124
    %vm131 = vmor %vm129, %vm130
    %v132 = vsel %vm131, %v124, %v128
    %v133 = vand.u32 2147483647, %v123
    %vm134 = vcmp.eq.f32.partialorder %v133, 8.507059e+37
    %v135 = vand.u32 %v123, 2147483648
    %v136 = vor.u32 1.1754944e-38, %v135
    %v137 = vsel %vm134, %v136, %v132
    %v138 = vmul.f32 1.0, %v137
    %v140 = vsel %vm60, %v138, 0
    %142 = vmatpush.msra.mxu0 0.0
    %143 = vmatpush.msra.mxu0 0.0
    %144 = vmatpush.msra.mxu0 0.0
    %145 = vmatpush.msra.mxu0 0.0
    %146 = vmatpush.msra.mxu0 0.0
    %147 = vmatpush.msra.mxu0 0.0
    %148 = vmatpush.msra.mxu0 0.0
    %149 = vmatpush.msra.mxu0 0.0
    %150 = vmatpush.msra.mxu0 0.0
    %151 = vmatpush.msra.mxu0 0.0
    %152 = vmatpush.msra.mxu0 0.0
    %153 = vmatpush.msra.mxu0 0.0
    %154 = vmatpush.msra.mxu0 0.0
    %155 = vmatpush.msra.mxu0 0.0
    %156 = vmatpush.msra.mxu0 0.0
    %157 = vmatpush.msra.mxu0 %v66
    %158 = vmatmul.f32.gmra.mxu0 %v140
    %v159 = vpop.f32.mrf.mxu0
    %v160 = vadd.f32 0.0, %v159
    %161 = vdwg.mxu0
    %v162 = vmul.f32 %v88, %v160
    %v163 = vld [vmem:[%s1] sm:$0x1]
    %v165 = vperm.slane %v163, 0
    %v167 = vmul.f32 %v162, %v165
    %v168 = vld [vmem:[%s2] sm:$0x1]
    %v170 = vperm.slane %v168, 0
    %v172 = vadd.f32 %v167, %v170
    %173 = vst [vmem:[#allocation2] sm:$0xff] %v172
    // Predicated region
    $region22: #{tpu_custom_call.1} parent=1 // pred_check
      _
    $region23: #{tpu_custom_call.1} parent=1 // pred_check_branch
      %175 = sbr.rel (0) target = $region25
    $region24: #{tpu_custom_call.1} parent=1 // pred_region
      %177 = vsyncadd [#allocation3], 64
      %s178 = sshll.u32 [#allocation2], 4
      %s179 = int_to_ptr.vmem [resolvable:$true] %s178
      %s180 = sshll.u32 %s5, 4
      %s181 = int_to_ptr.hbm [resolvable:$true] %s180
      %186 = dma.vmem_to_hbm [thread:$0]  %s179, 64, %s181, [#allocation3], 64, 64, 4
    $region25: #{tpu_custom_call.1} parent=1 // pred_fallthru
      _
    // Predicated region
    $region26: #{tpu_custom_call.1} parent=1 // pred_check
      _
    $region27: #{tpu_custom_call.1} parent=1 // pred_check_branch
      %188 = sbr.rel (0) target = $region29
    $region28: #{tpu_custom_call.1} parent=1 // pred_region
      %190 = dma.done [#allocation3], 128
    $region29: #{tpu_custom_call.1} parent=1 // pred_fallthru
      _
    %191 = vsyncpa [#allocation3], 1

</llo_original>
